<compile_context>
chip_gen: v6e
topology: v6e:2x2x1
jax: 0.10.0
libtpu: 0.0.40
codegen_flags: <defaults>
</compile_context>

<pallas_src>
import functools

import jax
import jax.numpy as jnp
import numpy as np
from jax import lax
from jax.experimental import pallas as pl
from jax.experimental.pallas import tpu as pltpu


# --------------------------------------------------------------------------- kernel

def _resblock_kernel(x_ref, w1_ref, w2_ref, b_ref, out_ref, *, n_out, fused_skip):
    # x_ref  : (R, W*Cin)          bf16 lane-dense input rows (one row = one (n,h) line)
    # w1_ref : (W*Cin, n1)         bf16 banded conv1 weight (bn1 scale folded);
    #                              n1 = 2*W*Cout when the 1x1 skip is fused as extra
    #                              block-diagonal columns, else W*Cout (identity skip)
    # w2_ref : (W*Cout, W*Cout)    bf16 banded conv2 weight (bn2 scale folded)
    # b_ref  : (2, W*Cout) f32     row0 = conv1 bias*s1 + bn1 shift (tiled over W)
    #                              row1 = conv2 bias*s2 + bn2 shift + skip bias (tiled)
    # out_ref: (R, W*Cout) f32     lane-dense output slab
    bias = b_ref[...]                                          # (2, W*Cout) f32
    x = x_ref[...]                                             # (R, W*Cin) bf16

    # conv1 (+ fused 1x1 skip) as a single lane-dense matmul, f32 accumulation.
    y1 = jnp.dot(x, w1_ref[...], preferred_element_type=jnp.float32)
    if fused_skip:
        conv1 = y1[:, :n_out]
        ident = y1[:, n_out:]
    else:
        conv1 = y1
        ident = x.astype(jnp.float32)                          # nn.Identity() skip

    # bn1 (+conv1 bias) + ReLU, lane-dense f32.
    h = jnp.maximum(conv1 + bias[0:1, :], 0.0)

    # conv2 as a single lane-dense matmul (bf16 operands, f32 accumulation).
    y2 = jnp.dot(h.astype(w2_ref.dtype), w2_ref[...],
                 preferred_element_type=jnp.float32)

    # bn2 shift + residual add + ReLU, lane-dense f32, lane-dense store.
    out_ref[...] = jnp.maximum(y2 + ident + bias[1:2, :], 0.0).astype(out_ref.dtype)


# ------------------------------------------------------- host-side weight folding

def _band_conv_weight(w3, wd):
    """(3, Cin, Cout) tap weights -> block-tridiagonal (W*Cin, W*Cout) matrix.

    big[wi*Cin+ci, wo*Cout+co] = w3[wi-wo+1, ci, co] when |wi-wo| <= 1, else 0,
    which reproduces a width-3 'same' cross-correlation with zero padding.
    """
    _, cin, cout = w3.shape
    wi = jnp.arange(wd)[:, None]          # input spatial position
    wo = jnp.arange(wd)[None, :]          # output spatial position
    k = wi - wo + 1                       # tap index
    valid = (k >= 0) & (k <= 2)
    taps = w3[jnp.clip(k, 0, 2)]          # (W, W, Cin, Cout)
    taps = jnp.where(valid[:, :, None, None], taps, 0.0)
    return jnp.transpose(taps, (0, 2, 1, 3)).reshape(wd * cin, wd * cout)


def _band_skip_weight(wsk, wd):
    """(Cin, Cout) 1x1 skip conv -> block-diagonal (W*Cin, W*Cout) matrix."""
    cin, cout = wsk.shape
    eye = jnp.eye(wd, dtype=wsk.dtype)
    return jnp.einsum("ab,cd->acbd", eye, wsk).reshape(wd * cin, wd * cout)


# ----------------------------------------------------------- blocking heuristics

def _tpu_generation():
    """(vmem_bytes_per_core, num_tensorcores). v7x is the 64 MiB / 2-TC generation."""
    vmem_bytes = 128 << 20
    num_tc = 1
    try:
        info = pltpu.get_tpu_info()
        for name in ("vmem_capacity_bytes", "vmem_bytes", "vmem_capacity"):
            v = getattr(info, name, None)
            if isinstance(v, int) and v > 0:
                vmem_bytes = v
                break
        if vmem_bytes <= (64 << 20):      # v7x: 64 MiB VMEM per TC, 2 TCs per chip
            num_tc = 2
    except Exception:
        pass
    return vmem_bytes, num_tc


def _vmem_estimate(r, in_w, n1, n_out, x_bytes, w_bytes):
    in_tile = r * in_w * x_bytes
    out_tile = r * n_out * 4
    weights = (in_w * n1 + n_out * n_out) * w_bytes + 2 * n_out * 4
    # live intermediates: y1 + h(f32 + bf16 copy) + y2 + ident, all f32-ish
    inter = r * (n1 * 4 + n_out * (4 + w_bytes + 4 + 4))
    return 2 * (in_tile + out_tile + weights) + inter


def _select_blocking(b, in_w, n1, n_out, x_bytes, w_bytes, rows_per_block):
    vmem_bytes, num_tc = _tpu_generation()
    budget = int(0.55 * vmem_bytes)

    r = max(8, min(rows_per_block, b))
    if num_tc >= 2 and b >= 16:
        # Split only when there are >=2 TensorCores to feed (v7x); on v5e/v6e a
        # single big block avoids extra per-step pipeline overhead.
        r = min(r, pl.cdiv(b, num_tc))
    r = max(8, (r // 8) * 8)
    while r > 8 and _vmem_estimate(r, in_w, n1, n_out, x_bytes, w_bytes) > budget:
        r = max(8, ((r // 2) // 8) * 8)

    nblk = pl.cdiv(b, r)
    if num_tc >= 2 and nblk > 1:
        nblk = pl.cdiv(nblk, num_tc) * num_tc     # even block count per core
    b_pad = nblk * r

    est = _vmem_estimate(r, in_w, n1, n_out, x_bytes, w_bytes)
    vmem_limit = int(min(0.85 * vmem_bytes, max(32 << 20, 4 * est)))
    return r, nblk, b_pad, vmem_limit


# ---------------------------------------------------------------------- wrapper

def residual_cnn_block(x_nchw, params, *, rows_per_block=1024,
                       compute_dtype=jnp.bfloat16):
    """Forward pass of ResidualCNNBlock. x_nchw: (N, Cin, H, W) float32."""
    n, cin, hgt, wd = x_nchw.shape
    cout = params["s1"].shape[-1]
    b = n * hgt
    n_out = wd * cout
    in_w = wd * cin
    fused_skip = "wsk" in params          # PyTorch: 1x1 skip conv iff Cin != Cout
    if not fused_skip:
        assert cin == cout, "identity skip requires Cin == Cout"

    # ---- host-side parameter folding (in production: do once at load time) ----
    w1_band = _band_conv_weight(params["w1"] * params["s1"], wd)       # bn1 scale folded
    w2_band = _band_conv_weight(params["w2"] * params["s2"], wd)       # bn2 scale folded
    if fused_skip:
        w1_full = jnp.concatenate([w1_band, _band_skip_weight(params["wsk"], wd)],
                                  axis=1)                               # (W*Cin, 2*W*Cout)
        bsk_t = jnp.tile(params["bsk"].reshape(1, cout), (1, wd))
    else:
        w1_full = w1_band                                               # (W*Cin, W*Cout)
        bsk_t = jnp.zeros((1, n_out), jnp.float32)
    bias1_t = jnp.tile(params["b1"].reshape(1, cout) * params["s1"] + params["t1"],
                       (1, wd))
    bias2_t = jnp.tile(params["b2"].reshape(1, cout) * params["s2"] + params["t2"],
                       (1, wd)) + bsk_t
    bpack = jnp.concatenate([bias1_t, bias2_t], axis=0).astype(jnp.float32)  # (2, W*Cout)

    w1_full = w1_full.astype(compute_dtype)
    w2_band = w2_band.astype(compute_dtype)
    n1 = w1_full.shape[1]

    # NCHW -> (N*H, W*Cin) lane-dense bf16 rows; W handling is inside the banded weight.
    x_rows = jnp.transpose(x_nchw, (0, 2, 3, 1)).reshape(b, in_w).astype(compute_dtype)

    x_bytes = jnp.dtype(compute_dtype).itemsize
    r, nblk, b_pad, vmem_limit = _select_blocking(
        b, in_w, n1, n_out, x_bytes, x_bytes, rows_per_block)
    if b_pad != b:
        x_rows = jnp.pad(x_rows, ((0, b_pad - b), (0, 0)))

    kernel = functools.partial(_resblock_kernel, n_out=n_out, fused_skip=fused_skip)
    grid_spec = pltpu.PrefetchScalarGridSpec(
        num_scalar_prefetch=0,
        grid=(nblk,),
        in_specs=[
            pl.BlockSpec((r, in_w), lambda i: (i, 0)),            # x rows
            pl.BlockSpec((in_w, n1), lambda i: (0, 0)),           # banded conv1 (+skip)
            pl.BlockSpec((n_out, n_out), lambda i: (0, 0)),       # banded conv2
            pl.BlockSpec((2, n_out), lambda i: (0, 0)),           # packed shifts
        ],
        out_specs=pl.BlockSpec((r, n_out), lambda i: (i, 0)),
    )
    out2d = pl.pallas_call(
        kernel,
        out_shape=jax.ShapeDtypeStruct((b_pad, n_out), jnp.float32),
        grid_spec=grid_spec,
        compiler_params=pltpu.CompilerParams(
            dimension_semantics=("parallel",),
            vmem_limit_bytes=vmem_limit),
    )(x_rows, w1_full, w2_band, bpack)

    # (B_pad, W*Cout) -> (N, Cout, H, W)
    out_rows = out2d[:b].reshape(n, hgt, wd, cout)
    return jnp.transpose(out_rows, (0, 3, 1, 2))


# ------------------------------------------------------ params & pure-JAX reference

def make_params(key, cin, cout, eps=1e-5):
    """Synthetic conv weights + folded inference-mode BatchNorm parameters."""
    ks = jax.random.split(key, 16)
    w1 = 0.2 * jax.random.normal(ks[0], (3, cin, cout), jnp.float32)
    b1 = 0.1 * jax.random.normal(ks[1], (1, cout), jnp.float32)
    w2 = 0.2 * jax.random.normal(ks[2], (3, cout, cout), jnp.float32)
    b2 = 0.1 * jax.random.normal(ks[3], (1, cout), jnp.float32)

    def bn(kg, kb, km, kv):
        gamma = 0.5 + jax.random.uniform(kg, (cout,), jnp.float32)
        beta = 0.1 * jax.random.normal(kb, (cout,), jnp.float32)
        mean = 0.1 * jax.random.normal(km, (cout,), jnp.float32)
        var = 0.5 + jax.random.uniform(kv, (cout,), jnp.float32)
        scale = gamma / jnp.sqrt(var + eps)
        shift = beta - mean * scale
        return scale.reshape(1, cout), shift.reshape(1, cout)

    s1, t1 = bn(ks[6], ks[7], ks[8], ks[9])
    s2, t2 = bn(ks[10], ks[11], ks[12], ks[13])
    p = dict(w1=w1, b1=b1, s1=s1, t1=t1, w2=w2, b2=b2, s2=s2, t2=t2)
    if cin != cout:   # PyTorch module: 1x1 skip conv only when channel counts differ
        p["wsk"] = 0.2 * jax.random.normal(ks[4], (cin, cout), jnp.float32)
        p["bsk"] = 0.1 * jax.random.normal(ks[5], (1, cout), jnp.float32)
    return p


def reference_forward(x_nchw, p):
    """Pure-JAX (f32) reference mirroring the PyTorch forward."""
    x = jnp.transpose(x_nchw, (0, 2, 3, 1))  # NHWC

    def conv13(inp, w3, bias):
        w = w3.reshape(1, 3, w3.shape[1], w3.shape[2])
        y = lax.conv_general_dilated(
            inp, w, window_strides=(1, 1), padding=((0, 0), (1, 1)),
            dimension_numbers=("NHWC", "HWIO", "NHWC"))
        return y + bias.reshape(1, 1, 1, -1)

    if "wsk" in p:
        ident = jnp.einsum("nhwc,cd->nhwd", x, p["wsk"]) + p["bsk"].reshape(1, 1, 1, -1)
    else:
        ident = x
    out = conv13(x, p["w1"], p["b1"])
    out = jnp.maximum(out * p["s1"].reshape(1, 1, 1, -1)
                      + p["t1"].reshape(1, 1, 1, -1), 0.0)
    out = conv13(out, p["w2"], p["b2"])
    out = out * p["s2"].reshape(1, 1, 1, -1) + p["t2"].reshape(1, 1, 1, -1)
    out = jnp.maximum(out + ident, 0.0)
    return jnp.transpose(out, (0, 3, 1, 2))


if __name__ == "__main__":
    key = jax.random.PRNGKey(0)
    kx, kp, kx2, kp2 = jax.random.split(key, 4)
    fwd = jax.jit(residual_cnn_block)

    # Case 1: channel-changing block -> real 1x1 conv skip (fused into conv1 matmul).
    N, Cin, Cout, H, W = 2, 4, 8, 16, 16
    x = jax.random.normal(kx, (N, Cin, H, W), jnp.float32)
    params = make_params(kp, Cin, Cout)
    out = jax.block_until_ready(fwd(x, params))
    ref = jax.block_until_ready(reference_forward(x, params))
    assert out.shape == (N, Cout, H, W)
    np.testing.assert_allclose(np.asarray(out), np.asarray(ref), rtol=3e-2, atol=3e-2)

    # Case 2: same channel count -> nn.Identity() skip (specialized kernel path).
    C2 = 8
    x2 = jax.random.normal(kx2, (N, C2, H, W), jnp.float32)
    params2 = make_params(kp2, C2, C2)
    out2 = jax.block_until_ready(fwd(x2, params2))
    ref2 = jax.block_until_ready(reference_forward(x2, params2))
    np.testing.assert_allclose(np.asarray(out2), np.asarray(ref2), rtol=3e-2, atol=3e-2)

    print("KERNEL_OK")
</pallas_src>

<mosaic_0001>
module attributes {stable_mosaic.version = 11 : i64} {
  func.func @_resblock_kernel(%arg0: i32, %arg1: memref<32x64xbf16, #tpu.memory_space<vmem>>, %arg2: memref<64x256xbf16, #tpu.memory_space<vmem>>, %arg3: memref<128x128xbf16, #tpu.memory_space<vmem>>, %arg4: memref<2x128xf32, #tpu.memory_space<vmem>>, %arg5: memref<32x128xf32, #tpu.memory_space<vmem>>) attributes {dimension_semantics = [#tpu.dimension_semantics<parallel>], iteration_bounds = array<i64: 1>, scalar_prefetch = 0 : i64, scratch_operands = 0 : i64, tpu.core_type = #tpu.core_type<tc>, window_params = [{transform_indices = @transform_0, window_bounds = array<i64: 32, 64>}, {pipeline_mode = #tpu.pipeline_mode<synchronous>, transform_indices = @transform_1, window_bounds = array<i64: 64, 256>}, {pipeline_mode = #tpu.pipeline_mode<synchronous>, transform_indices = @transform_2, window_bounds = array<i64: 128, 128>}, {pipeline_mode = #tpu.pipeline_mode<synchronous>, transform_indices = @transform_3, window_bounds = array<i64: 2, 128>}, {transform_indices = @transform_4, window_bounds = array<i64: 32, 128>}]} {
    %c0 = arith.constant 0 : index
    %c0_0 = arith.constant 0 : index
    %0 = vector.load %arg4[%c0, %c0_0] : memref<2x128xf32, #tpu.memory_space<vmem>>, vector<2x128xf32>
    %c0_1 = arith.constant 0 : index
    %c0_2 = arith.constant 0 : index
    %1 = vector.load %arg1[%c0_1, %c0_2] : memref<32x64xbf16, #tpu.memory_space<vmem>>, vector<32x64xbf16>
    %c0_3 = arith.constant 0 : index
    %c0_4 = arith.constant 0 : index
    %2 = vector.load %arg2[%c0_3, %c0_4] : memref<64x256xbf16, #tpu.memory_space<vmem>>, vector<64x256xbf16>
    %cst = arith.constant dense<0.000000e+00> : vector<32x256xf32>
    %3 = tpu.matmul %1, %2, %cst {dimension_numbers = #tpu.dot_dimension_numbers<[1], [0], [0], [1], [0, 0, 1, 1], [], []>} : vector<32x64xbf16>, vector<64x256xbf16>, vector<32x256xf32> -> vector<32x256xf32>
    %4 = vector.extract_strided_slice %3 {offsets = [0, 0], sizes = [32, 128], strides = [1, 1]} : vector<32x256xf32> to vector<32x128xf32>
    %5 = vector.extract_strided_slice %3 {offsets = [0, 128], sizes = [32, 128], strides = [1, 1]} : vector<32x256xf32> to vector<32x128xf32>
    %6 = vector.extract_strided_slice %0 {offsets = [0, 0], sizes = [1, 128], strides = [1, 1]} : vector<2x128xf32> to vector<1x128xf32>
    %7 = vector.broadcast %6 : vector<1x128xf32> to vector<32x128xf32>
    %8 = arith.addf %4, %7 : vector<32x128xf32>
    %cst_5 = arith.constant 0.000000e+00 : f32
    %9 = vector.broadcast %cst_5 : f32 to vector<32x128xf32>
    %10 = arith.maximumf %8, %9 : vector<32x128xf32>
    %11 = arith.truncf %10 : vector<32x128xf32> to vector<32x128xbf16>
    %c0_6 = arith.constant 0 : index
    %c0_7 = arith.constant 0 : index
    %12 = vector.load %arg3[%c0_6, %c0_7] : memref<128x128xbf16, #tpu.memory_space<vmem>>, vector<128x128xbf16>
    %cst_8 = arith.constant dense<0.000000e+00> : vector<32x128xf32>
    %13 = tpu.matmul %11, %12, %cst_8 {dimension_numbers = #tpu.dot_dimension_numbers<[1], [0], [0], [1], [0, 0, 1, 1], [], []>} : vector<32x128xbf16>, vector<128x128xbf16>, vector<32x128xf32> -> vector<32x128xf32>
    %14 = arith.addf %13, %5 : vector<32x128xf32>
    %15 = vector.extract_strided_slice %0 {offsets = [1, 0], sizes = [1, 128], strides = [1, 1]} : vector<2x128xf32> to vector<1x128xf32>
    %16 = vector.broadcast %15 : vector<1x128xf32> to vector<32x128xf32>
    %17 = arith.addf %14, %16 : vector<32x128xf32>
    %cst_9 = arith.constant 0.000000e+00 : f32
    %18 = vector.broadcast %cst_9 : f32 to vector<32x128xf32>
    %19 = arith.maximumf %17, %18 : vector<32x128xf32>
    %c0_10 = arith.constant 0 : index
    %c0_11 = arith.constant 0 : index
    %20 = vector.load %arg5[%c0_10, %c0_11] : memref<32x128xf32, #tpu.memory_space<vmem>>, vector<32x128xf32>
    tpu.vector_store %arg5[%c0_10, %c0_11], %19 {strides = array<i32>} : memref<32x128xf32, #tpu.memory_space<vmem>>, vector<32x128xf32>,
    return
  }
  func.func @transform_0(%arg0: i32) -> (i32, i32) {
    %c0_i32 = arith.constant 0 : i32
    %c0_i32_0 = arith.constant 0 : i32
    return %arg0, %c0_i32 : i32, i32
  }
  func.func @transform_1(%arg0: i32) -> (i32, i32) {
    %c0_i32 = arith.constant 0 : i32
    %c0_i32_0 = arith.constant 0 : i32
    %c0_i32_1 = arith.constant 0 : i32
    return %c0_i32, %c0_i32_0 : i32, i32
  }
  func.func @transform_2(%arg0: i32) -> (i32, i32) {
    %c0_i32 = arith.constant 0 : i32
    %c0_i32_0 = arith.constant 0 : i32
    %c0_i32_1 = arith.constant 0 : i32
    return %c0_i32, %c0_i32_0 : i32, i32
  }
  func.func @transform_3(%arg0: i32) -> (i32, i32) {
    %c0_i32 = arith.constant 0 : i32
    %c0_i32_0 = arith.constant 0 : i32
    %c0_i32_1 = arith.constant 0 : i32
    return %c0_i32, %c0_i32_0 : i32, i32
  }
  func.func @transform_4(%arg0: i32) -> (i32, i32) {
    %c0_i32 = arith.constant 0 : i32
    %c0_i32_0 = arith.constant 0 : i32
    return %arg0, %c0_i32 : i32, i32
  }
}

</mosaic_0001>

<llo_original>
// kernel: residual_cnn_block.1
$region0: #{residual_cnn_block.1}
  #allocation0 [shape = 'u32[]', space=smem, size = 0x4, offset = 0x4, fixed_abs, tag = 'smem constant byte address 0x4 - core index']
  #allocation1 [shape = 'u32[144,128]{1,0:T(1,128)}', space=vmem, size = 0x12000, scoped, tag = 'internal scratch']
  %s0 = inlined_call_operand.vmem [shape: bf16[32,64], index: 0, kind: input, shape index: {}]
  %s1 = inlined_call_operand.vmem [shape: bf16[64,256], index: 1, kind: input, shape index: {}]
  %s2 = inlined_call_operand.vmem [shape: bf16[128,128], index: 2, kind: input, shape index: {}]
  %s3 = inlined_call_operand.vmem [shape: f32[2,128], index: 3, kind: input, shape index: {}]
  %s4 = inlined_call_operand.vmem [shape: f32[32,128], index: 4, kind: output, shape index: {}]
  %s5 = sld [smem:[#allocation0]]
  $region26: #{residual_cnn_block.1} parent=0
    _
  %s7 = ssub.s32 1, %s5
  %s8 = scalar_select 0, %s7, %s5
  // Predicated region
  $region2: #{residual_cnn_block.1} parent=0 // pred_check
    _
  $region3: #{residual_cnn_block.1} parent=0 // pred_check_branch
    %10 = sbr.rel (0) target = $region5
  $region4: #{residual_cnn_block.1} parent=0 // pred_region
    _
  $region5: #{residual_cnn_block.1} parent=0 // pred_fallthru
    _
  // Predicated region
  $region6: #{residual_cnn_block.1} parent=0 // pred_check
    _
  $region7: #{residual_cnn_block.1} parent=0 // pred_check_branch
    %12 = sbr.rel (0) target = $region9
  $region8: #{residual_cnn_block.1} parent=0 // pred_region
    _
  $region9: #{residual_cnn_block.1} parent=0 // pred_fallthru
    _
  // Predicated region
  $region10: #{residual_cnn_block.1} parent=0 // pred_check
    _
  $region11: #{residual_cnn_block.1} parent=0 // pred_check_branch
    %14 = sbr.rel (0) target = $region13
  $region12: #{residual_cnn_block.1} parent=0 // pred_region
    _
  $region13: #{residual_cnn_block.1} parent=0 // pred_fallthru
    _
  // Predicated region
  $region14: #{residual_cnn_block.1} parent=0 // pred_check
    _
  $region15: #{residual_cnn_block.1} parent=0 // pred_check_branch
    %16 = sbr.rel (0) target = $region17
  $region16: #{residual_cnn_block.1} parent=0 // pred_region
    _
  $region17: #{residual_cnn_block.1} parent=0 // pred_fallthru
    _
  %v18 = vld [vmem:[%s3] sm:$0x3]
  %v19 = vld [vmem:[%s0] sm:$0xf]
  %v20 = vld [vmem:[%s0 + $0x4] sm:$0xf]
  %v21 = vld [vmem:[%s0 + $0x8] sm:$0xf]
  %v22 = vld [vmem:[%s0 + $0xc] sm:$0xf]
  %v23 = vld [vmem:[%s1] sm:$0xff]
  %v24 = vld [vmem:[%s1 + $0x8] sm:$0xff]
  %v25 = vld [vmem:[%s1 + $0x10] sm:$0xff]
  %v26 = vld [vmem:[%s1 + $0x18] sm:$0xff]
  %v27 = vld [vmem:[%s1 + $0x20] sm:$0xff]
  %v28 = vld [vmem:[%s1 + $0x28] sm:$0xff]
  %v29 = vld [vmem:[%s1 + $0x30] sm:$0xff]
  %v30 = vld [vmem:[%s1 + $0x38] sm:$0xff]
  %v35 = vunpack.c.l.b16 %v19
  %v36 = vunpack.c.l.b16 %v20
  %v37 = vunpack.c.l.b16 %v21
  %v38 = vunpack.c.l.b16 %v22
  %v39 = vpack.c.b16 %v36, %v35
  %v40 = vpack.c.b16 %v38, %v37
  %v49 = vunpack.c.l.b16 %v23
  %v50 = vunpack.c.h.b16 %v23
  %v51 = vunpack.c.l.b16 %v24
  %v52 = vunpack.c.h.b16 %v24
  %v53 = vunpack.c.l.b16 %v25
  %v54 = vunpack.c.h.b16 %v25
  %v55 = vunpack.c.l.b16 %v26
  %v56 = vunpack.c.h.b16 %v26
  %v57 = vunpack.c.l.b16 %v27
  %v58 = vunpack.c.h.b16 %v27
  %v59 = vunpack.c.l.b16 %v28
  %v60 = vunpack.c.h.b16 %v28
  %v61 = vunpack.c.l.b16 %v29
  %v62 = vunpack.c.h.b16 %v29
  %v63 = vunpack.c.l.b16 %v30
  %v64 = vunpack.c.h.b16 %v30
  %v65 = vpack.c.b16 %v51, %v49
  %v66 = vpack.c.b16 %v52, %v50
  %v67 = vpack.c.b16 %v55, %v53
  %v68 = vpack.c.b16 %v56, %v54
  %v69 = vpack.c.b16 %v59, %v57
  %v70 = vpack.c.b16 %v60, %v58
  %v71 = vpack.c.b16 %v63, %v61
  %v72 = vpack.c.b16 %v64, %v62
  %vm81 = vcmask 523264
  %v83 = vsel %vm81, %v39, 0
  %v86 = vsel %vm81, %v40, 0
  %88 = vmatprep.subr.bf16.mxu0 0
  %89 = vmatpush1.bf16.msra.mxu0 0
  %90 = vmatprep.subr.bf16.mxu0 0
  %91 = vmatpush1.bf16.msra.mxu0 0
  %92 = vmatprep.subr.bf16.mxu0 0
  %93 = vmatpush1.bf16.msra.mxu0 0
  %94 = vmatprep.subr.bf16.mxu0 0
  %95 = vmatpush1.bf16.msra.mxu0 0
  %96 = vmatprep.subr.bf16.mxu0 %v72
  %97 = vmatpush1.bf16.msra.mxu0 %v71
  %98 = vmatprep.subr.bf16.mxu0 %v70
  %99 = vmatpush1.bf16.msra.mxu0 %v69
  %100 = vmatprep.subr.bf16.mxu0 %v68
  %101 = vmatpush1.bf16.msra.mxu0 %v67
  %102 = vmatprep.subr.bf16.mxu0 %v66
  %103 = vmatpush1.bf16.msra.mxu0 %v65
  %104 = vmatprep.subr.bf16.mxu0 0
  %105 = vmatpush2.bf16.msra.mxu0 0
  %106 = vmatprep.subr.bf16.mxu0 0
  %107 = vmatpush2.bf16.msra.mxu0 0
  %108 = vmatprep.subr.bf16.mxu0 0
  %109 = vmatpush2.bf16.msra.mxu0 0
  %110 = vmatprep.subr.bf16.mxu0 0
  %111 = vmatpush2.bf16.msra.mxu0 0
  %112 = vmatprep.subr.bf16.mxu0 0
  %113 = vmatpush2.bf16.msra.mxu0 0
  %114 = vmatprep.subr.bf16.mxu0 0
  %115 = vmatpush2.bf16.msra.mxu0 0
  %116 = vmatprep.subr.bf16.mxu0 0
  %117 = vmatpush2.bf16.msra.mxu0 0
  %118 = vmatprep.subr.bf16.mxu0 0
  %119 = vmatpush2.bf16.msra.mxu0 0
  %120 = vmatprep.mubr.bf16.mxu0 0
  %121 = vmatmul.mubr.bf16.gmra.mxu0 %v83
  %v122 = vpop.f32.mrf.mxu0
  %v123 = vadd.f32 0.0, %v122
  %v124 = vpop.f32.mrf.mxu0
  %v125 = vadd.f32 0.0, %v124
  %v126 = vpop.f32.mrf.mxu0
  %v127 = vadd.f32 0.0, %v126
  %v128 = vpop.f32.mrf.mxu0
  %v129 = vadd.f32 0.0, %v128
  %130 = vmatprep.mubr.bf16.mxu0 0
  %131 = vmatmul.mubr.bf16.gmra.mxu0 %v86
  %v132 = vpop.f32.mrf.mxu0
  %v133 = vadd.f32 0.0, %v132
  %v134 = vpop.f32.mrf.mxu0
  %v135 = vadd.f32 0.0, %v134
  %v136 = vpop.f32.mrf.mxu0
  %v137 = vadd.f32 0.0, %v136
  %v138 = vpop.f32.mrf.mxu0
  %v139 = vadd.f32 0.0, %v138
  %140 = vdwg.mxu0
  %v141 = vlaneseq
  %v142 = vshrl.u32 %v141, 7
  %v143 = vsub.s32 0, %v142
  %v144 = vrot.slane %v18, %v143
  %v145 = vadd.f32 %v123, %v144
  %v146 = vadd.f32 %v127, %v144
  %v147 = vadd.f32 %v133, %v144
  %v148 = vadd.f32 %v137, %v144
  %v149 = vmax.f32 %v145, 0.0
  %v150 = vmax.f32 %v146, 0.0
  %v151 = vmax.f32 %v147, 0.0
  %v152 = vmax.f32 %v148, 0.0
  %v153 = vpack.c.bf16 %v150, %v149
  %v154 = vpack.c.bf16 %v152, %v151
  %v155 = vld [vmem:[%s2] sm:$0xf]
  %v156 = vld [vmem:[%s2 + $0x4] sm:$0xf]
  %v157 = vld [vmem:[%s2 + $0x8] sm:$0xf]
  %v158 = vld [vmem:[%s2 + $0xc] sm:$0xf]
  %v159 = vld [vmem:[%s2 + $0x10] sm:$0xf]
  %v160 = vld [vmem:[%s2 + $0x14] sm:$0xf]
  %v161 = vld [vmem:[%s2 + $0x18] sm:$0xf]
  %v162 = vld [vmem:[%s2 + $0x1c] sm:$0xf]
  %v163 = vld [vmem:[%s2 + $0x20] sm:$0xf]
  %v164 = vld [vmem:[%s2 + $0x24] sm:$0xf]
  %v165 = vld [vmem:[%s2 + $0x28] sm:$0xf]
  %v166 = vld [vmem:[%s2 + $0x2c] sm:$0xf]
  %v167 = vld [vmem:[%s2 + $0x30] sm:$0xf]
  %v168 = vld [vmem:[%s2 + $0x34] sm:$0xf]
  %v169 = vld [vmem:[%s2 + $0x38] sm:$0xf]
  %v170 = vld [vmem:[%s2 + $0x3c] sm:$0xf]
  %v187 = vunpack.c.l.b16 %v155
  %v188 = vunpack.c.l.b16 %v156
  %v189 = vunpack.c.l.b16 %v157
  %v190 = vunpack.c.l.b16 %v158
  %v191 = vunpack.c.l.b16 %v159
  %v192 = vunpack.c.l.b16 %v160
  %v193 = vunpack.c.l.b16 %v161
  %v194 = vunpack.c.l.b16 %v162
  %v195 = vunpack.c.l.b16 %v163
  %v196 = vunpack.c.l.b16 %v164
  %v197 = vunpack.c.l.b16 %v165
  %v198 = vunpack.c.l.b16 %v166
  %v199 = vunpack.c.l.b16 %v167
  %v200 = vunpack.c.l.b16 %v168
  %v201 = vunpack.c.l.b16 %v169
  %v202 = vunpack.c.l.b16 %v170
  %v203 = vpack.c.b16 %v188, %v187
  %v204 = vpack.c.b16 %v190, %v189
  %v205 = vpack.c.b16 %v192, %v191
  %v206 = vpack.c.b16 %v194, %v193
  %v207 = vpack.c.b16 %v196, %v195
  %v208 = vpack.c.b16 %v198, %v197
  %v209 = vpack.c.b16 %v200, %v199
  %v210 = vpack.c.b16 %v202, %v201
  %219 = vmatprep.subr.bf16.mxu0 0
  %220 = vmatpush1.bf16.msra.mxu0 %v210
  %221 = vmatprep.subr.bf16.mxu0 0
  %222 = vmatpush1.bf16.msra.mxu0 %v209
  %223 = vmatprep.subr.bf16.mxu0 0
  %224 = vmatpush1.bf16.msra.mxu0 %v208
  %225 = vmatprep.subr.bf16.mxu0 0
  %226 = vmatpush1.bf16.msra.mxu0 %v207
  %227 = vmatprep.subr.bf16.mxu0 0
  %228 = vmatpush1.bf16.msra.mxu0 %v206
  %229 = vmatprep.subr.bf16.mxu0 0
  %230 = vmatpush1.bf16.msra.mxu0 %v205
  %231 = vmatprep.subr.bf16.mxu0 0
  %232 = vmatpush1.bf16.msra.mxu0 %v204
  %233 = vmatprep.subr.bf16.mxu0 0
  %234 = vmatpush1.bf16.msra.mxu0 %v203
  %235 = vmatprep.subr.bf16.mxu0 0
  %236 = vmatpush2.bf16.msra.mxu0 0
  %237 = vmatprep.subr.bf16.mxu0 0
  %238 = vmatpush2.bf16.msra.mxu0 0
  %239 = vmatprep.subr.bf16.mxu0 0
  %240 = vmatpush2.bf16.msra.mxu0 0
  %241 = vmatprep.subr.bf16.mxu0 0
  %242 = vmatpush2.bf16.msra.mxu0 0
  %243 = vmatprep.subr.bf16.mxu0 0
  %244 = vmatpush2.bf16.msra.mxu0 0
  %245 = vmatprep.subr.bf16.mxu0 0
  %246 = vmatpush2.bf16.msra.mxu0 0
  %247 = vmatprep.subr.bf16.mxu0 0
  %248 = vmatpush2.bf16.msra.mxu0 0
  %249 = vmatprep.subr.bf16.mxu0 0
  %250 = vmatpush2.bf16.msra.mxu0 0
  %251 = vmatprep.mubr.bf16.mxu0 0
  %252 = vmatmul.mubr.bf16.gmra.mxu0 %v153
  %v253 = vpop.f32.mrf.mxu0
  %v254 = vadd.f32 %v125, %v253
  %v255 = vpop.f32.mrf.mxu0
  %v256 = vpop.f32.mrf.mxu0
  %v257 = vadd.f32 %v129, %v256
  %v258 = vpop.f32.mrf.mxu0
  %259 = vmatprep.mubr.bf16.mxu0 0
  %260 = vmatmul.mubr.bf16.gmra.mxu0 %v154
  %v261 = vpop.f32.mrf.mxu0
  %v262 = vadd.f32 %v135, %v261
  %v263 = vpop.f32.mrf.mxu0
  %v264 = vpop.f32.mrf.mxu0
  %v265 = vadd.f32 %v139, %v264
  %v266 = vpop.f32.mrf.mxu0
  %267 = vdwg.mxu0
  %v268 = vlaneseq
  %v269 = vshrl.u32 %v268, 7
  %v270 = vsub.s32 1, %v269
  %v271 = vrot.slane %v18, %v270
  %v272 = vadd.f32 %v254, %v271
  %v273 = vadd.f32 %v257, %v271
  %v274 = vadd.f32 %v262, %v271
  %v275 = vadd.f32 %v265, %v271
  %v276 = vmax.f32 %v272, 0.0
  %v277 = vmax.f32 %v273, 0.0
  %v278 = vmax.f32 %v274, 0.0
  %v279 = vmax.f32 %v275, 0.0
  %280 = vst [vmem:[%s4] sm:$0xff] %v276
  %281 = vst [vmem:[%s4 + $0x8] sm:$0xff] %v277
  %282 = vst [vmem:[%s4 + $0x10] sm:$0xff] %v278
  %283 = vst [vmem:[%s4 + $0x18] sm:$0xff] %v279
  // Predicated region
  $region18: #{residual_cnn_block.1} parent=0 // pred_check
    _
  $region19: #{residual_cnn_block.1} parent=0 // pred_check_branch
    %285 = sbr.rel (0) target = $region21
  $region20: #{residual_cnn_block.1} parent=0 // pred_region
    _
  $region21: #{residual_cnn_block.1} parent=0 // pred_fallthru
    _
  // Predicated region
  $region22: #{residual_cnn_block.1} parent=0 // pred_check
    _
  $region23: #{residual_cnn_block.1} parent=0 // pred_check_branch
    %287 = sbr.rel (0) target = $region25
  $region24: #{residual_cnn_block.1} parent=0 // pred_region
    _
  $region25: #{residual_cnn_block.1} parent=0 // pred_fallthru
    _

</llo_original>
